<compile_context>
chip_gen: v5e
topology: v5e:2x2
jax: 0.10.0
libtpu: 0.0.40
codegen_flags: <defaults>
</compile_context>

<pallas_src>
import functools

import numpy as np
import jax
import jax.numpy as jnp
from jax import lax
from jax.experimental import pallas as pl
from jax.experimental.pallas import tpu as pltpu


def _round_up(x, m):
    return ((x + m - 1) // m) * m


def _round_down(x, m):
    return (x // m) * m


def _linear_kernel(x_ref, w_ref, o_ref, acc_ref, *, k_total, tk, ragged_k):
    """One (i, j, kk) grid step: acc += x_tile @ w_tile (f32 accumulation).

    x_ref: (tm, tk)  activations, K on lanes
    w_ref: (tk, tn)  weight in (K, N) layout -> native MXU feed, lane-dense output
    o_ref: (tm, tn)  written (cast to output dtype) on the last K step
    """
    kk = pl.program_id(2)

    @pl.when(kk == 0)
    def _():
        acc_ref[...] = jnp.zeros_like(acc_ref)

    x_t = x_ref[...]
    w_t = w_ref[...]
    if ragged_k:
        # Last K block is partial: Pallas leaves the out-of-bounds tail of the
        # VMEM buffers unspecified, so zero it before feeding the MXU.
        valid = k_total - kk * tk                      # == tk for all but the last step
        lane = lax.broadcasted_iota(jnp.int32, x_t.shape, 1)
        x_t = jnp.where(lane < valid, x_t, jnp.zeros_like(x_t))
        sub = lax.broadcasted_iota(jnp.int32, w_t.shape, 0)
        w_t = jnp.where(sub < valid, w_t, jnp.zeros_like(w_t))

    acc_ref[...] += jnp.dot(x_t, w_t, preferred_element_type=jnp.float32)

    @pl.when(kk == pl.num_programs(2) - 1)
    def _():
        o_ref[...] = acc_ref[...].astype(o_ref.dtype)


def prepare_linear_weight(weight, dtype=jnp.bfloat16):
    """One-time weight preparation (do at param-init time, NOT per forward call).

    `weight` is the module parameter as used by its einsum ('o i, ... i -> ... o'),
    i.e. shape (N_out, K).  Returns the (K, N_out) layout (K on sublanes, N on
    lanes = native MXU RHS feed), cast to the compute dtype so the hot path never
    astypes / transposes / pads the weight through HBM.
    """
    return jnp.asarray(weight).T.astype(dtype)


def linear_forward(x, w_kn, *, tm=512, tn=1024, tk=1024, compute_dtype=jnp.bfloat16):
    """y[..., o] = sum_i W[o, i] * x[..., i]  (module einsum 'oi,...i->...o').

    `w_kn` is the pre-transposed weight from `prepare_linear_weight`, shape
    (K, N) = (contracted dim, output dim).  The default path casts activations to
    bfloat16 for the MXU and accumulates in float32; the output keeps x's dtype.
    Pass compute_dtype=jnp.float32 (with an f32 w_kn) for exact-f32 math.
    """
    *batch_dims, k = x.shape
    k_w, n = w_kn.shape
    assert k == k_w, f"trailing dim of x ({k}) must match w_kn.shape[0] ({k_w})"

    out_dtype = x.dtype
    m = int(np.prod(batch_dims)) if batch_dims else 1
    x2d = x.reshape(m, k)

    if compute_dtype is None:
        cdt = jnp.dtype(jnp.result_type(x2d.dtype, w_kn.dtype))
    else:
        cdt = jnp.dtype(compute_dtype)
    if x2d.dtype != cdt:
        x2d = x2d.astype(cdt)
    if w_kn.dtype != cdt:
        # NOTE: per-call cast = one extra HBM pass over the whole weight.  Store
        # the prepared weight in the compute dtype (prepare_linear_weight default).
        w_kn = w_kn.astype(cdt)

    # ---------------- tile selection (8/128-aligned, VMEM-bounded) ----------------
    sub_pack = max(1, 4 // cdt.itemsize)          # elements per 32-bit sublane slot
    tm_align = 8 * sub_pack                       # 8 (f32), 16 (bf16), 32 (int8/fp8)
    tm = max(8, _round_down(tm, 8))
    tn = max(128, _round_down(tn, 128))
    tk = max(128, _round_down(tk, 128))

    tm_eff = min(tm, _round_up(m, tm_align))      # sublane-aligned row tile

    if n % 128 == 0:
        tn_eff = min(tn, n)                       # lane-dense, unmasked stores
    elif n <= tn:
        tn_eff = n                                # full-dim block (legal); masked tail lanes only
    else:
        tn_eff = tn                               # 128-multiple; last N block partial (masked stores)

    if k <= tk:
        tk_eff, num_k, ragged_k = k, 1, False     # single K step; full-dim block is legal
    else:
        tk_eff = 0
        for d in range(min(tk, _round_down(k, 128)), 127, -128):
            if k % d == 0:                        # largest 128-multiple divisor of K <= tk
                tk_eff = d
                break
        if tk_eff:
            num_k, ragged_k = k // tk_eff, False
        else:
            # No 128-multiple divisor: keep tk and mask the ragged last K tile
            # in-kernel (no per-call jnp.pad of x / weight through HBM).
            tk_eff, num_k, ragged_k = tk, pl.cdiv(k, tk), True

    grid_m = pl.cdiv(m, tm_eff)
    grid_n = pl.cdiv(n, tn_eff)

    # v7x megacore: if the whole GEMM is a single (i, j) tile, split N so both
    # TensorCores get a parallel tile (harmless on single-TC v5e/v6e).
    if grid_m == 1 and grid_n == 1 and n >= 256:
        tn_eff = _round_up(pl.cdiv(n, 2), 128)
        grid_n = pl.cdiv(n, tn_eff)

    grid = (grid_m, grid_n, num_k)

    # ---------------- VMEM budget / compiler params ----------------
    out_isize = jnp.dtype(out_dtype).itemsize
    vmem_bytes = (2 * (tm_eff * tk_eff + tk_eff * tn_eff) * cdt.itemsize   # double-buffered inputs
                  + 2 * tm_eff * tn_eff * out_isize                        # double-buffered output
                  + tm_eff * tn_eff * 4)                                   # f32 accumulator
    # Raise the scoped-VMEM cap only as far as needed; stay well under v7x's 64 MiB/TC.
    vmem_limit = int(min(max(vmem_bytes * 5 // 4 + (2 << 20), 32 << 20), 48 << 20))

    cost = pl.CostEstimate(
        flops=2 * m * n * k,
        transcendentals=0,
        bytes_accessed=(w_kn.size * w_kn.dtype.itemsize * grid_m     # weight re-streamed per M tile
                        + x2d.size * x2d.dtype.itemsize * grid_n     # x re-streamed per N tile
                        + m * n * out_isize),
    )

    kernel = functools.partial(_linear_kernel, k_total=k, tk=tk_eff, ragged_k=ragged_k)

    out = pl.pallas_call(
        kernel,
        out_shape=jax.ShapeDtypeStruct((m, n), out_dtype),
        grid_spec=pltpu.PrefetchScalarGridSpec(
            num_scalar_prefetch=0,
            grid=grid,
            in_specs=[
                pl.BlockSpec((tm_eff, tk_eff), lambda i, j, kk: (i, kk)),   # x tile  (M, K)
                pl.BlockSpec((tk_eff, tn_eff), lambda i, j, kk: (kk, j)),   # w tile  (K, N)
            ],
            out_specs=pl.BlockSpec((tm_eff, tn_eff), lambda i, j, kk: (i, j)),
            scratch_shapes=[pltpu.VMEM((tm_eff, tn_eff), jnp.float32)],
        ),
        compiler_params=pltpu.CompilerParams(
            dimension_semantics=("parallel", "parallel", "arbitrary"),
            vmem_limit_bytes=vmem_limit,
        ),
        cost_estimate=cost,
    )(x2d, w_kn)

    return out.reshape(*batch_dims, n)


def init_linear_weight(key, in_features, out_features, dtype=jnp.float32):
    """Matches the module constructor: trunc_normal_(zeros([in_features, out_features]),
    std=sqrt(2/(in+out)), a=-3*std, b=3*std).  Per the module's einsum, the FIRST
    axis of this parameter is the output dim and the SECOND axis is contracted."""
    std = np.sqrt(2.0 / (in_features + out_features))
    w = jax.random.truncated_normal(
        key, lower=-3.0, upper=3.0, shape=(in_features, out_features), dtype=jnp.float32
    ) * std
    return w.astype(dtype)


if __name__ == "__main__":
    key = jax.random.PRNGKey(0)
    kw, kx, kw2, kx2 = jax.random.split(key, 4)

    # ---- Case 1: module-literal shapes, default bf16 MXU path ----------------
    in_features, out_features = 32, 64
    batch, seq = 2, 8
    weight = init_linear_weight(kw, in_features, out_features)          # stored (32, 64)
    # Module einsum: weight.shape[0] (=32) is the output dim, weight.shape[1] (=64) contracted.
    x = jax.random.normal(kx, (batch, seq, out_features), jnp.float32)  # (..., 64)

    w_kn = prepare_linear_weight(weight)          # (64, 32) bf16 — prepared once, not per call
    y = jax.block_until_ready(linear_forward(x, w_kn))
    assert y.shape == (batch, seq, in_features), y.shape
    # Reference on bf16-rounded operands with f32 accumulation (same numerics contract).
    y_ref = jnp.einsum(
        "oi,bsi->bso",
        weight.astype(jnp.bfloat16).astype(jnp.float32),
        x.astype(jnp.bfloat16).astype(jnp.float32),
        precision=lax.Precision.HIGHEST,
    )
    assert jnp.allclose(y, y_ref, atol=2e-2, rtol=2e-2), "bf16 path mismatch vs reference"

    # ---- Case 2: exact f32 path; ragged K tiling + partial M/N blocks --------
    n2, k2 = 160, 320
    w2 = init_linear_weight(kw2, n2, k2)                    # stored (160, 320): 320 -> 160 map
    x2 = jax.random.normal(kx2, (3, 5, k2), jnp.float32)    # m=15 (partial M blocks)
    w2_kn = prepare_linear_weight(w2, dtype=jnp.float32)    # (320, 160) f32
    y2 = jax.block_until_ready(
        linear_forward(x2, w2_kn, tm=8, tn=128, tk=128, compute_dtype=jnp.float32)
    )
    y2_ref = jnp.einsum("oi,bsi->bso", w2, x2, precision=lax.Precision.HIGHEST)
    assert y2.shape == (3, 5, n2), y2.shape
    assert jnp.allclose(y2, y2_ref, atol=1e-4, rtol=1e-4), "f32 ragged-K path mismatch"

    print("KERNEL_OK")
</pallas_src>

<mosaic_0001>
module attributes {stable_mosaic.version = 11 : i64} {
  func.func @_linear_kernel(%arg0: i32, %arg1: i32, %arg2: i32, %arg3: memref<16x64xbf16, #tpu.memory_space<vmem>>, %arg4: memref<64x32xbf16, #tpu.memory_space<vmem>>, %arg5: memref<16x32xf32, #tpu.memory_space<vmem>>, %arg6: memref<16x32xf32, #tpu.memory_space<vmem>>) attributes {dimension_semantics = [#tpu.dimension_semantics<parallel>, #tpu.dimension_semantics<parallel>, #tpu.dimension_semantics<arbitrary>], iteration_bounds = array<i64: 1, 1, 1>, scalar_prefetch = 0 : i64, scratch_operands = 1 : i64, tpu.core_type = #tpu.core_type<tc>, window_params = [{transform_indices = @transform_0, window_bounds = array<i64: 16, 64>}, {transform_indices = @transform_1, window_bounds = array<i64: 64, 32>}, {transform_indices = @transform_2, window_bounds = array<i64: 16, 32>}]} {
    %c0_i32 = arith.constant 0 : i32
    %0 = arith.cmpi eq, %arg2, %c0_i32 : i32
    %1 = arith.extui %0 : i1 to i32
    %c0_i32_0 = arith.constant 0 : i32
    %2 = arith.cmpi ne, %1, %c0_i32_0 : i32
    scf.if %2 {
      %cst_10 = arith.constant 0.000000e+00 : f32
      %12 = vector.broadcast %cst_10 : f32 to vector<16x32xf32>
      %c0_11 = arith.constant 0 : index
      %c0_12 = arith.constant 0 : index
      %13 = vector.load %arg6[%c0_11, %c0_12] : memref<16x32xf32, #tpu.memory_space<vmem>>, vector<16x32xf32>
      tpu.vector_store %arg6[%c0_11, %c0_12], %12 {strides = array<i32>} : memref<16x32xf32, #tpu.memory_space<vmem>>, vector<16x32xf32>,
    } else {
    }
    %c0 = arith.constant 0 : index
    %c0_1 = arith.constant 0 : index
    %3 = vector.load %arg3[%c0, %c0_1] : memref<16x64xbf16, #tpu.memory_space<vmem>>, vector<16x64xbf16>
    %c0_2 = arith.constant 0 : index
    %c0_3 = arith.constant 0 : index
    %4 = vector.load %arg4[%c0_2, %c0_3] : memref<64x32xbf16, #tpu.memory_space<vmem>>, vector<64x32xbf16>
    %c0_4 = arith.constant 0 : index
    %c0_5 = arith.constant 0 : index
    %5 = vector.load %arg6[%c0_4, %c0_5] : memref<16x32xf32, #tpu.memory_space<vmem>>, vector<16x32xf32>
    %cst = arith.constant dense<0.000000e+00> : vector<16x32xf32>
    %6 = tpu.matmul %3, %4, %cst {dimension_numbers = #tpu.dot_dimension_numbers<[1], [0], [0], [1], [0, 0, 1, 1], [], []>} : vector<16x64xbf16>, vector<64x32xbf16>, vector<16x32xf32> -> vector<16x32xf32>
    %7 = arith.addf %5, %6 : vector<16x32xf32>
    %c0_6 = arith.constant 0 : index
    %c0_7 = arith.constant 0 : index
    %8 = vector.load %arg6[%c0_6, %c0_7] : memref<16x32xf32, #tpu.memory_space<vmem>>, vector<16x32xf32>
    tpu.vector_store %arg6[%c0_6, %c0_7], %7 {strides = array<i32>} : memref<16x32xf32, #tpu.memory_space<vmem>>, vector<16x32xf32>,
    %c0_i32_8 = arith.constant 0 : i32
    %9 = arith.cmpi eq, %arg2, %c0_i32_8 : i32
    %10 = arith.extui %9 : i1 to i32
    %c0_i32_9 = arith.constant 0 : i32
    %11 = arith.cmpi ne, %10, %c0_i32_9 : i32
    scf.if %11 {
      %c0_10 = arith.constant 0 : index
      %c0_11 = arith.constant 0 : index
      %12 = vector.load %arg6[%c0_10, %c0_11] : memref<16x32xf32, #tpu.memory_space<vmem>>, vector<16x32xf32>
      %c0_12 = arith.constant 0 : index
      %c0_13 = arith.constant 0 : index
      %13 = vector.load %arg5[%c0_12, %c0_13] : memref<16x32xf32, #tpu.memory_space<vmem>>, vector<16x32xf32>
      tpu.vector_store %arg5[%c0_12, %c0_13], %12 {strides = array<i32>} : memref<16x32xf32, #tpu.memory_space<vmem>>, vector<16x32xf32>,
    } else {
    }
    return
  }
  func.func @transform_0(%arg0: i32, %arg1: i32, %arg2: i32) -> (i32, i32) {
    %c0_i32 = arith.constant 0 : i32
    return %arg0, %arg2 : i32, i32
  }
  func.func @transform_1(%arg0: i32, %arg1: i32, %arg2: i32) -> (i32, i32) {
    %c0_i32 = arith.constant 0 : i32
    return %arg2, %arg1 : i32, i32
  }
  func.func @transform_2(%arg0: i32, %arg1: i32, %arg2: i32) -> (i32, i32) {
    %c0_i32 = arith.constant 0 : i32
    return %arg0, %arg1 : i32, i32
  }
}

</mosaic_0001>

<llo_original>
// kernel: tpu_custom_call.1
$region0: #{tpu_custom_call.1}
  #allocation0 [shape = 'u32[]', space=smem, size = 0x4, offset = 0x4, fixed_abs, tag = 'smem constant byte address 0x4 - core index']
  #allocation1 [shape = 'u32[72,128]{1,0:T(1,128)}', space=vmem, size = 0x9000, scoped, tag = 'internal scratch']
  #allocation2 [shape = 'f32[16,32]{1,0:T(8,128)}', space=vmem, size = 0x2000, scoped, tag = 'scratch operand']
  %s0 = inlined_call_operand.vmem [shape: bf16[16,64], index: 0, kind: input, shape index: {}]
  %s1 = inlined_call_operand.vmem [shape: bf16[64,32], index: 1, kind: input, shape index: {}]
  %s2 = inlined_call_operand.hbm [shape: f32[16,32], index: 2, kind: output, shape index: {}]
  %s3 = sld [smem:[#allocation0]]
  $region26: #{tpu_custom_call.1} parent=0
    _
  %s5 = ssub.s32 1, %s3
  %s6 = scalar_select 0, %s5, %s3
  $region1: #{tpu_custom_call.1} parent=0
    #allocation3 [shape = 'u8[8192]{0}', space=vmem, size = 0x2000, scoped, tag = 'output window, operand 0, single buffered']
    #allocation4 [shape = 's32[1]{0}', space=sflag, size = 0x4, scoped, tag = 'scoped memory for tpu_custom_call.1']
    %7 = vsyncpa [#allocation4], 0
    // Predicated region
    $region2: #{tpu_custom_call.1} parent=1 // pred_check
      _
    $region3: #{tpu_custom_call.1} parent=1 // pred_check_branch
      %9 = sbr.rel (0) target = $region5
    $region4: #{tpu_custom_call.1} parent=1 // pred_region
      _
    $region5: #{tpu_custom_call.1} parent=1 // pred_fallthru
      _
    // Predicated region
    $region6: #{tpu_custom_call.1} parent=1 // pred_check
      _
    $region7: #{tpu_custom_call.1} parent=1 // pred_check_branch
      %11 = sbr.rel (0) target = $region9
    $region8: #{tpu_custom_call.1} parent=1 // pred_region
      _
    $region9: #{tpu_custom_call.1} parent=1 // pred_fallthru
      _
    %p13 = scmp.eq.s32.totalorder 0, 0
    // Predicated region
    $region10: #{tpu_custom_call.1} parent=1 // pred_check
      %p14 = pneg %p13
    $region11: #{tpu_custom_call.1} parent=1 // pred_check_branch
      %16 = sbr.rel (%p14) target = $region13
    $region12: #{tpu_custom_call.1} parent=1 // pred_region
      %vm17 = vcmask 261120
      %18 = vst.msk [vmem:[#allocation2] sm:$0xff] %vm17, 0.0
      %19 = vst.msk [vmem:[#allocation2 + $0x8] sm:$0xff] %vm17, 0.0
    $region13: #{tpu_custom_call.1} parent=1 // pred_fallthru
      _
    %v20 = vld [vmem:[%s0] sm:$0xf]
    %v21 = vld [vmem:[%s0 + $0x4] sm:$0xf]
    %v22 = vld [vmem:[%s1] sm:$0xf]
    %v23 = vld [vmem:[%s1 + $0x4] sm:$0xf]
    %v24 = vld [vmem:[%s1 + $0x8] sm:$0xf]
    %v25 = vld [vmem:[%s1 + $0xc] sm:$0xf]
    %v26 = vld [vmem:[%s1 + $0x10] sm:$0xf]
    %v27 = vld [vmem:[%s1 + $0x14] sm:$0xf]
    %v28 = vld [vmem:[%s1 + $0x18] sm:$0xf]
    %v29 = vld [vmem:[%s1 + $0x1c] sm:$0xf]
    %v30 = vld [vmem:[#allocation2] sm:$0xff]
    %v31 = vld [vmem:[#allocation2 + $0x8] sm:$0xff]
    %v34 = vunpack.c.l.b16 %v20
    %v35 = vunpack.c.l.b16 %v21
    %v36 = vpack.c.b16 %v35, %v34
    %v45 = vunpack.c.l.b16 %v22
    %v46 = vunpack.c.l.b16 %v23
    %v47 = vunpack.c.l.b16 %v24
    %v48 = vunpack.c.l.b16 %v25
    %v49 = vunpack.c.l.b16 %v26
    %v50 = vunpack.c.l.b16 %v27
    %v51 = vunpack.c.l.b16 %v28
    %v52 = vunpack.c.l.b16 %v29
    %v53 = vpack.c.b16 %v46, %v45
    %v54 = vpack.c.b16 %v48, %v47
    %v55 = vpack.c.b16 %v50, %v49
    %v56 = vpack.c.b16 %v52, %v51
    %vm61 = vcmask 523264
    %v63 = vsel %vm61, %v36, 0
    %65 = vmatpush.bf16.msra.mxu0 0
    %66 = vmatpush.bf16.msra.mxu0 0
    %67 = vmatpush.bf16.msra.mxu0 0
    %68 = vmatpush.bf16.msra.mxu0 0
    %69 = vmatpush.bf16.msra.mxu0 %v56
    %70 = vmatpush.bf16.msra.mxu0 %v55
    %71 = vmatpush.bf16.msra.mxu0 %v54
    %72 = vmatpush.bf16.msra.mxu0 %v53
    %73 = vmatmul.bf16.gmra.mxu0 %v63
    %v74 = vpop.f32.mrf.mxu0
    %v75 = vadd.f32 0.0, %v74
    %v76 = vpop.f32.mrf.mxu0
    %v77 = vadd.f32 0.0, %v76
    %78 = vdwg.mxu0
    %v79 = vadd.f32 %v30, %v75
    %v80 = vadd.f32 %v31, %v77
    %vm81 = vcmask 261120
    %82 = vst.msk [vmem:[#allocation2] sm:$0xff] %vm81, %v79
    %83 = vst.msk [vmem:[#allocation2 + $0x8] sm:$0xff] %vm81, %v80
    // Predicated region
    $region14: #{tpu_custom_call.1} parent=1 // pred_check
      %p84 = pneg %p13
    $region15: #{tpu_custom_call.1} parent=1 // pred_check_branch
      %86 = sbr.rel (%p84) target = $region17
    $region16: #{tpu_custom_call.1} parent=1 // pred_region
      %v87 = vld [vmem:[#allocation2] sm:$0xff]
      %v88 = vld [vmem:[#allocation2 + $0x8] sm:$0xff]
      %89 = vst.msk [vmem:[#allocation3] sm:$0xff] %vm81, %v87
      %90 = vst.msk [vmem:[#allocation3 + $0x8] sm:$0xff] %vm81, %v88
    $region17: #{tpu_custom_call.1} parent=1 // pred_fallthru
      _
    // Predicated region
    $region18: #{tpu_custom_call.1} parent=1 // pred_check
      _
    $region19: #{tpu_custom_call.1} parent=1 // pred_check_branch
      %92 = sbr.rel (0) target = $region21
    $region20: #{tpu_custom_call.1} parent=1 // pred_region
      %94 = vsyncadd [#allocation4], 0
      %s95 = sshll.u32 [#allocation3], 4
      %s96 = int_to_ptr.vmem [resolvable:$true] %s95
      %s97 = sshll.u32 %s2, 4
      %s98 = int_to_ptr.hbm [resolvable:$true] %s97
      %103 = dma.vmem_to_hbm [thread:$0]  %s96, 256, %s98, [#allocation4], 128, 128, 8
    $region21: #{tpu_custom_call.1} parent=1 // pred_fallthru
      _
    // Predicated region
    $region22: #{tpu_custom_call.1} parent=1 // pred_check
      _
    $region23: #{tpu_custom_call.1} parent=1 // pred_check_branch
      %105 = sbr.rel (0) target = $region25
    $region24: #{tpu_custom_call.1} parent=1 // pred_region
      %107 = dma.done [#allocation4], 256
    $region25: #{tpu_custom_call.1} parent=1 // pred_fallthru
      _
    %108 = vsyncpa [#allocation4], 1

</llo_original>
